<compile_context>
chip_gen: v7x
topology: tpu7x:2x2x1
jax: 0.10.0
libtpu: 0.0.40
codegen_flags: <defaults>
</compile_context>

<pallas_src>
import jax
import jax.numpy as jnp
from jax.experimental import pallas as pl
from jax.experimental.pallas import tpu as pltpu


def _round_up(x, m):
    return (x + m - 1) // m * m


def _embed_mean_pool_kernel(ids_ref, table_ref, out_ref):
    # ids_ref  : [1, Bpad, S]      int32  (feature f)
    # table_ref: [1, Vtile, Dpad]  bf16   (feature f, vocab tile k)
    # out_ref  : [Bpad, Dpad]      f32    (feature-f output slab; resident over k)
    k = pl.program_id(1)

    @pl.when(k == 0)
    def _init():
        out_ref[...] = jnp.zeros_like(out_ref)

    ids = ids_ref[0]                                      # [Bpad, S] int32
    b_pad, seq_len = ids.shape
    v_tile = table_ref.shape[1]

    # Vocab ids covered by this tile (f32 compares are exact for ids << 2^24).
    v_iota = (jax.lax.broadcasted_iota(jnp.int32, (b_pad, v_tile), 1)
              + k * v_tile).astype(jnp.float32)
    s_iota = jax.lax.broadcasted_iota(jnp.int32, (b_pad, seq_len), 1)
    ids_f = ids.astype(jnp.float32)

    # counts[b, v] = #{s : ids[b, s] == v} for v in this vocab tile, built
    # WITHOUT a [B, S, V] intermediate.  Column s is extracted with a
    # select + lane-reduce (XLU) instead of a dynamic lane slice, so the
    # fori_loop body uses only well-supported vector ops.
    def body(s, counts):
        col = jnp.sum(jnp.where(s_iota == s, ids_f, 0.0), axis=1, keepdims=True)
        return counts + (col == v_iota).astype(jnp.float32)

    counts = jax.lax.fori_loop(
        0, seq_len, body,
        jnp.zeros((b_pad, v_tile), jnp.float32),
        unroll=min(8, seq_len))
    # No pad-mask needed in the numerator: the <PAD> (id 0) table row is zero.

    # MXU bf16 path: counts <= S <= 256 are exact in bf16; accumulate in f32
    # directly into the VMEM-resident output block (no separate scratch).
    out_ref[...] += jnp.dot(counts.astype(jnp.bfloat16), table_ref[0],
                            preferred_element_type=jnp.float32)

    @pl.when(k == pl.num_programs(1) - 1)
    def _finalize():
        tok = jnp.sum((ids != 0).astype(jnp.float32), axis=1, keepdims=True)
        inv = pl.reciprocal(jnp.maximum(tok, 1.0), approx=True)   # EUP slot
        out_ref[...] *= inv


def fused_embed_mean_pool(ids, tables, *, v_tile):
    """ids: [F, Bpad, S] int32, tables: [F, Vpad, Dpad] bf16 -> [Bpad, F*Dpad] f32."""
    n_feat, b_pad, seq_len = ids.shape
    _, v_pad, d_pad = tables.shape
    assert v_pad % v_tile == 0 and b_pad % 8 == 0 and d_pad % 128 == 0
    assert seq_len <= 256, "bf16 counts are exact only for seq_len <= 256"
    return pl.pallas_call(
        _embed_mean_pool_kernel,
        out_shape=jax.ShapeDtypeStruct((b_pad, n_feat * d_pad), jnp.float32),
        grid_spec=pltpu.PrefetchScalarGridSpec(
            num_scalar_prefetch=0,
            grid=(n_feat, v_pad // v_tile),
            in_specs=[
                pl.BlockSpec((1, b_pad, seq_len), lambda f, k: (f, 0, 0)),
                pl.BlockSpec((1, v_tile, d_pad), lambda f, k: (f, k, 0)),
            ],
            # One (Bpad, Dpad) slab per feature at column-block f; constant over
            # the vocab-reduction axis k -> out_ref is the resident accumulator.
            out_specs=pl.BlockSpec((b_pad, d_pad), lambda f, k: (0, f)),
        ),
        compiler_params=pltpu.CompilerParams(
            dimension_semantics=("parallel", "arbitrary"),
            vmem_limit_bytes=32 * 1024 * 1024,
        ),
    )(ids, tables)


class DebrimEmbedderPallas:
    """JAX/Pallas port of DebrimEmbedder (seq_pooling='mean')."""

    def __init__(self, vocab_dict, embedding_dim=128, seq_pooling="mean", *,
                 key, v_tile=2048):
        assert seq_pooling == "mean", "only 'mean' pooling is implemented"
        self.vocab_dict = vocab_dict
        self.embedding_dim = embedding_dim
        self.seq_pooling = seq_pooling
        self.feature_names = list(vocab_dict.keys())
        self.output_dim = embedding_dim * len(vocab_dict)
        self.d_pad = _round_up(embedding_dim, 128)

        # Vocab tile: big enough to amortize per-step grid overhead and reach
        # HBM roofline, capped by (a) a VMEM budget that fits every generation
        # (<= ~8 MiB of double-buffered bf16 table tiles, well under the v7x
        # 32 MiB scoped limit) and (b) the real (rounded) vocab size.
        v_max = max(len(v) for v in vocab_dict.values())
        cap_by_vmem = max(256, ((8 << 20) // (2 * 2 * self.d_pad)) // 256 * 256)
        cap_by_vocab = _round_up(v_max, 256)
        self.v_tile = max(256, min(_round_up(v_tile, 256), cap_by_vmem, cap_by_vocab))
        self.v_pad = _round_up(v_max, self.v_tile)

        # Per-feature f32 tables (mirrors nn.Embedding with padding_idx row = 0);
        # kept in f32 for reference/training, streamed to the kernel as bf16.
        self.tables = {}
        for i, (col, vocab) in enumerate(vocab_dict.items()):
            k = jax.random.fold_in(key, i)
            tbl = jax.random.normal(k, (len(vocab), embedding_dim), jnp.float32)
            tbl = tbl.at[vocab["<PAD>"]].set(0.0)
            self.tables[col] = tbl

        # Stack & pre-cast ONCE to bf16 [F, Vpad, Dpad]; padding rows/cols are
        # zero so they contribute nothing to the matmul.
        stacked = jnp.zeros((len(self.feature_names), self.v_pad, self.d_pad),
                            jnp.float32)
        for f, name in enumerate(self.feature_names):
            tbl = self.tables[name]
            stacked = stacked.at[f, :tbl.shape[0], :embedding_dim].set(tbl)
        self.stacked_tables = stacked.astype(jnp.bfloat16)

    def __call__(self, seq_feats, scalars=None):
        names = list(seq_feats.keys())
        if names == self.feature_names:
            tables = self.stacked_tables
        else:  # preserve the PyTorch concat order (= seq_feats iteration order)
            perm = jnp.array([self.feature_names.index(n) for n in names],
                             jnp.int32)
            tables = self.stacked_tables[perm]

        ids_list = [seq_feats[n] for n in names]
        batch = ids_list[0].shape[0]
        s_max = max(int(x.shape[1]) for x in ids_list)
        b_pad = _round_up(batch, 8)

        # Stack & pad ids to [F, Bpad, Smax]; pad value 0 = <PAD> (masked out).
        # NOTE: ids are assumed in-range [0, len(vocab)); out-of-range ids would
        # bias the mean low here whereas PyTorch nn.Embedding raises.
        ids = jnp.zeros((len(names), b_pad, s_max), jnp.int32)
        for f, x in enumerate(ids_list):
            ids = ids.at[f, :x.shape[0], :x.shape[1]].set(x.astype(jnp.int32))

        pooled = fused_embed_mean_pool(ids, tables, v_tile=self.v_tile)
        # [Bpad, F*Dpad] -> [B, F*D]
        n_feat, d = len(names), self.embedding_dim
        if self.d_pad == d:
            out = pooled[:batch]                       # concat already free
        else:
            out = pooled.reshape(b_pad, n_feat, self.d_pad)[:batch, :, :d]
            out = out.reshape(batch, n_feat * d)
        return out, scalars


def _reference_forward(embedder, seq_feats):
    """Pure-JAX f32 reference mirroring the PyTorch forward."""
    pooled = []
    for name, ids in seq_feats.items():
        emb = jnp.take(embedder.tables[name], ids, axis=0)          # [B, S, D]
        mask = (ids != 0)[..., None].astype(jnp.float32)            # [B, S, 1]
        summed = (emb * mask).sum(axis=1)                           # [B, D]
        counts = jnp.maximum(mask.sum(axis=1), 1.0)                 # [B, 1]
        pooled.append(summed / counts)
    return jnp.concatenate(pooled, axis=1)


if __name__ == "__main__":
    key = jax.random.PRNGKey(0)

    # Two categorical features with small vocabularies; '<PAD>' id is 0.
    vocab_item = {"<PAD>": 0, **{f"item_{i}": i for i in range(1, 11)}}   # V=11
    vocab_cat = {"<PAD>": 0, **{f"cat_{i}": i for i in range(1, 7)}}      # V=7
    vocab_dict = {"item": vocab_item, "category": vocab_cat}

    B, S, D = 2, 8, 32
    k_params, k_item, k_cat = jax.random.split(key, 3)

    embedder = DebrimEmbedderPallas(vocab_dict, embedding_dim=D,
                                    seq_pooling="mean", key=k_params)

    seq_item = jax.random.randint(k_item, (B, S), 0, len(vocab_item), jnp.int32)
    seq_cat = jax.random.randint(k_cat, (B, S), 0, len(vocab_cat), jnp.int32)
    seq_feats = {"item": seq_item, "category": seq_cat}
    scalars = {"price": jnp.ones((B,), jnp.float32)}

    out, scalars_out = embedder(seq_feats, scalars)
    out = jax.block_until_ready(out)

    assert out.shape == (B, embedder.output_dim), out.shape
    ref = _reference_forward(embedder, seq_feats)
    # Loosened tolerance: kernel uses bf16 tables / bf16 MXU operands and an
    # approx reciprocal against an f32 reference.
    assert jnp.allclose(out, ref, atol=3e-2, rtol=3e-2), "mismatch vs reference"
    assert scalars_out is scalars

    print("KERNEL_OK")
</pallas_src>

<mosaic_0001>
module attributes {stable_mosaic.version = 11 : i64} {
  func.func @_embed_mean_pool_kernel(%arg0: i32, %arg1: i32, %arg2: memref<1x8x8xi32, #tpu.memory_space<vmem>>, %arg3: memref<1x256x128xbf16, #tpu.memory_space<vmem>>, %arg4: memref<8x128xf32, #tpu.memory_space<vmem>>) attributes {dimension_semantics = [#tpu.dimension_semantics<parallel>, #tpu.dimension_semantics<arbitrary>], iteration_bounds = array<i64: 2, 1>, scalar_prefetch = 0 : i64, scratch_operands = 0 : i64, tpu.core_type = #tpu.core_type<tc>, window_params = [{transform_indices = @transform_0, window_bounds = array<i64: 1, 8, 8>}, {transform_indices = @transform_1, window_bounds = array<i64: 1, 256, 128>}, {transform_indices = @transform_2, window_bounds = array<i64: 8, 128>}]} {
    %c0_i32 = arith.constant 0 : i32
    %0 = arith.cmpi eq, %arg1, %c0_i32 : i32
    %1 = arith.extui %0 : i1 to i32
    %c0_i32_0 = arith.constant 0 : i32
    %2 = arith.cmpi ne, %1, %c0_i32_0 : i32
    scf.if %2 {
      %cst_30 = arith.constant 0.000000e+00 : f32
      %111 = vector.broadcast %cst_30 : f32 to vector<8x128xf32>
      %c0_31 = arith.constant 0 : index
      %c0_32 = arith.constant 0 : index
      %112 = vector.load %arg4[%c0_31, %c0_32] : memref<8x128xf32, #tpu.memory_space<vmem>>, vector<8x128xf32>
      tpu.vector_store %arg4[%c0_31, %c0_32], %111 {strides = array<i32>} : memref<8x128xf32, #tpu.memory_space<vmem>>, vector<8x128xf32>,
    } else {
    }
    %c0 = arith.constant 0 : index
    %c0_1 = arith.constant 0 : index
    %c0_2 = arith.constant 0 : index
    %3 = vector.load %arg2[%c0, %c0_1, %c0_2] : memref<1x8x8xi32, #tpu.memory_space<vmem>>, vector<1x8x8xi32>
    %4 = vector.shape_cast %3 : vector<1x8x8xi32> to vector<8x8xi32>
    %5 = tpu.iota {dimensions = array<i32: 1>} : vector<8x256xi32>
    %c256_i32 = arith.constant 256 : i32
    %6 = arith.muli %arg1, %c256_i32 : i32
    %7 = vector.broadcast %6 : i32 to vector<8x256xi32>
    %8 = arith.addi %5, %7 : vector<8x256xi32>
    %9 = arith.sitofp %8 : vector<8x256xi32> to vector<8x256xf32>
    %10 = tpu.iota {dimensions = array<i32: 1>} : vector<8x8xi32>
    %11 = arith.sitofp %4 : vector<8x8xi32> to vector<8x8xf32>
    %cst = arith.constant 0.000000e+00 : f32
    %12 = vector.broadcast %cst : f32 to vector<8x256xf32>
    %c0_i32_3 = arith.constant 0 : i32
    %13 = vector.broadcast %c0_i32_3 : i32 to vector<8x8xi32>
    %14 = arith.cmpi eq, %10, %13 : vector<8x8xi32>
    %cst_4 = arith.constant 0.000000e+00 : f32
    %15 = vector.broadcast %cst_4 : f32 to vector<8x8xf32>
    %16 = arith.select %14, %11, %15 : vector<8x8xi1>, vector<8x8xf32>
    %cst_5 = arith.constant dense<0.000000e+00> : vector<8xf32>
    %17 = vector.multi_reduction <add>, %16, %cst_5 [1] : vector<8x8xf32> to vector<8xf32>
    %18 = vector.shape_cast %17 : vector<8xf32> to vector<8x1xf32>
    %19 = vector.broadcast %18 : vector<8x1xf32> to vector<8x256xf32>
    %20 = arith.cmpf oeq, %19, %9 : vector<8x256xf32>
    %21 = arith.extui %20 : vector<8x256xi1> to vector<8x256xi32>
    %22 = arith.sitofp %21 : vector<8x256xi32> to vector<8x256xf32>
    %23 = arith.addf %12, %22 : vector<8x256xf32>
    %c1_i32 = arith.constant 1 : i32
    %24 = vector.broadcast %c1_i32 : i32 to vector<8x8xi32>
    %25 = arith.cmpi eq, %10, %24 : vector<8x8xi32>
    %cst_6 = arith.constant 0.000000e+00 : f32
    %26 = vector.broadcast %cst_6 : f32 to vector<8x8xf32>
    %27 = arith.select %25, %11, %26 : vector<8x8xi1>, vector<8x8xf32>
    %cst_7 = arith.constant dense<0.000000e+00> : vector<8xf32>
    %28 = vector.multi_reduction <add>, %27, %cst_7 [1] : vector<8x8xf32> to vector<8xf32>
    %29 = vector.shape_cast %28 : vector<8xf32> to vector<8x1xf32>
    %30 = vector.broadcast %29 : vector<8x1xf32> to vector<8x256xf32>
    %31 = arith.cmpf oeq, %30, %9 : vector<8x256xf32>
    %32 = arith.extui %31 : vector<8x256xi1> to vector<8x256xi32>
    %33 = arith.sitofp %32 : vector<8x256xi32> to vector<8x256xf32>
    %34 = arith.addf %23, %33 : vector<8x256xf32>
    %c2_i32 = arith.constant 2 : i32
    %35 = vector.broadcast %c2_i32 : i32 to vector<8x8xi32>
    %36 = arith.cmpi eq, %10, %35 : vector<8x8xi32>
    %cst_8 = arith.constant 0.000000e+00 : f32
    %37 = vector.broadcast %cst_8 : f32 to vector<8x8xf32>
    %38 = arith.select %36, %11, %37 : vector<8x8xi1>, vector<8x8xf32>
    %cst_9 = arith.constant dense<0.000000e+00> : vector<8xf32>
    %39 = vector.multi_reduction <add>, %38, %cst_9 [1] : vector<8x8xf32> to vector<8xf32>
    %40 = vector.shape_cast %39 : vector<8xf32> to vector<8x1xf32>
    %41 = vector.broadcast %40 : vector<8x1xf32> to vector<8x256xf32>
    %42 = arith.cmpf oeq, %41, %9 : vector<8x256xf32>
    %43 = arith.extui %42 : vector<8x256xi1> to vector<8x256xi32>
    %44 = arith.sitofp %43 : vector<8x256xi32> to vector<8x256xf32>
    %45 = arith.addf %34, %44 : vector<8x256xf32>
    %c3_i32 = arith.constant 3 : i32
    %46 = vector.broadcast %c3_i32 : i32 to vector<8x8xi32>
    %47 = arith.cmpi eq, %10, %46 : vector<8x8xi32>
    %cst_10 = arith.constant 0.000000e+00 : f32
    %48 = vector.broadcast %cst_10 : f32 to vector<8x8xf32>
    %49 = arith.select %47, %11, %48 : vector<8x8xi1>, vector<8x8xf32>
    %cst_11 = arith.constant dense<0.000000e+00> : vector<8xf32>
    %50 = vector.multi_reduction <add>, %49, %cst_11 [1] : vector<8x8xf32> to vector<8xf32>
    %51 = vector.shape_cast %50 : vector<8xf32> to vector<8x1xf32>
    %52 = vector.broadcast %51 : vector<8x1xf32> to vector<8x256xf32>
    %53 = arith.cmpf oeq, %52, %9 : vector<8x256xf32>
    %54 = arith.extui %53 : vector<8x256xi1> to vector<8x256xi32>
    %55 = arith.sitofp %54 : vector<8x256xi32> to vector<8x256xf32>
    %56 = arith.addf %45, %55 : vector<8x256xf32>
    %c4_i32 = arith.constant 4 : i32
    %57 = vector.broadcast %c4_i32 : i32 to vector<8x8xi32>
    %58 = arith.cmpi eq, %10, %57 : vector<8x8xi32>
    %cst_12 = arith.constant 0.000000e+00 : f32
    %59 = vector.broadcast %cst_12 : f32 to vector<8x8xf32>
    %60 = arith.select %58, %11, %59 : vector<8x8xi1>, vector<8x8xf32>
    %cst_13 = arith.constant dense<0.000000e+00> : vector<8xf32>
    %61 = vector.multi_reduction <add>, %60, %cst_13 [1] : vector<8x8xf32> to vector<8xf32>
    %62 = vector.shape_cast %61 : vector<8xf32> to vector<8x1xf32>
    %63 = vector.broadcast %62 : vector<8x1xf32> to vector<8x256xf32>
    %64 = arith.cmpf oeq, %63, %9 : vector<8x256xf32>
    %65 = arith.extui %64 : vector<8x256xi1> to vector<8x256xi32>
    %66 = arith.sitofp %65 : vector<8x256xi32> to vector<8x256xf32>
    %67 = arith.addf %56, %66 : vector<8x256xf32>
    %c5_i32 = arith.constant 5 : i32
    %68 = vector.broadcast %c5_i32 : i32 to vector<8x8xi32>
    %69 = arith.cmpi eq, %10, %68 : vector<8x8xi32>
    %cst_14 = arith.constant 0.000000e+00 : f32
    %70 = vector.broadcast %cst_14 : f32 to vector<8x8xf32>
    %71 = arith.select %69, %11, %70 : vector<8x8xi1>, vector<8x8xf32>
    %cst_15 = arith.constant dense<0.000000e+00> : vector<8xf32>
    %72 = vector.multi_reduction <add>, %71, %cst_15 [1] : vector<8x8xf32> to vector<8xf32>
    %73 = vector.shape_cast %72 : vector<8xf32> to vector<8x1xf32>
    %74 = vector.broadcast %73 : vector<8x1xf32> to vector<8x256xf32>
    %75 = arith.cmpf oeq, %74, %9 : vector<8x256xf32>
    %76 = arith.extui %75 : vector<8x256xi1> to vector<8x256xi32>
    %77 = arith.sitofp %76 : vector<8x256xi32> to vector<8x256xf32>
    %78 = arith.addf %67, %77 : vector<8x256xf32>
    %c6_i32 = arith.constant 6 : i32
    %79 = vector.broadcast %c6_i32 : i32 to vector<8x8xi32>
    %80 = arith.cmpi eq, %10, %79 : vector<8x8xi32>
    %cst_16 = arith.constant 0.000000e+00 : f32
    %81 = vector.broadcast %cst_16 : f32 to vector<8x8xf32>
    %82 = arith.select %80, %11, %81 : vector<8x8xi1>, vector<8x8xf32>
    %cst_17 = arith.constant dense<0.000000e+00> : vector<8xf32>
    %83 = vector.multi_reduction <add>, %82, %cst_17 [1] : vector<8x8xf32> to vector<8xf32>
    %84 = vector.shape_cast %83 : vector<8xf32> to vector<8x1xf32>
    %85 = vector.broadcast %84 : vector<8x1xf32> to vector<8x256xf32>
    %86 = arith.cmpf oeq, %85, %9 : vector<8x256xf32>
    %87 = arith.extui %86 : vector<8x256xi1> to vector<8x256xi32>
    %88 = arith.sitofp %87 : vector<8x256xi32> to vector<8x256xf32>
    %89 = arith.addf %78, %88 : vector<8x256xf32>
    %c7_i32 = arith.constant 7 : i32
    %90 = vector.broadcast %c7_i32 : i32 to vector<8x8xi32>
    %91 = arith.cmpi eq, %10, %90 : vector<8x8xi32>
    %cst_18 = arith.constant 0.000000e+00 : f32
    %92 = vector.broadcast %cst_18 : f32 to vector<8x8xf32>
    %93 = arith.select %91, %11, %92 : vector<8x8xi1>, vector<8x8xf32>
    %cst_19 = arith.constant dense<0.000000e+00> : vector<8xf32>
    %94 = vector.multi_reduction <add>, %93, %cst_19 [1] : vector<8x8xf32> to vector<8xf32>
    %95 = vector.shape_cast %94 : vector<8xf32> to vector<8x1xf32>
    %96 = vector.broadcast %95 : vector<8x1xf32> to vector<8x256xf32>
    %97 = arith.cmpf oeq, %96, %9 : vector<8x256xf32>
    %98 = arith.extui %97 : vector<8x256xi1> to vector<8x256xi32>
    %99 = arith.sitofp %98 : vector<8x256xi32> to vector<8x256xf32>
    %100 = arith.addf %89, %99 : vector<8x256xf32>
    %c8_i32 = arith.constant 8 : i32
    %c0_20 = arith.constant 0 : index
    %c0_21 = arith.constant 0 : index
    %101 = vector.load %arg4[%c0_20, %c0_21] : memref<8x128xf32, #tpu.memory_space<vmem>>, vector<8x128xf32>
    %102 = arith.truncf %100 : vector<8x256xf32> to vector<8x256xbf16>
    %c0_22 = arith.constant 0 : index
    %c0_23 = arith.constant 0 : index
    %c0_24 = arith.constant 0 : index
    %103 = vector.load %arg3[%c0_22, %c0_23, %c0_24] : memref<1x256x128xbf16, #tpu.memory_space<vmem>>, vector<1x256x128xbf16>
    %104 = vector.shape_cast %103 : vector<1x256x128xbf16> to vector<256x128xbf16>
    %cst_25 = arith.constant dense<0.000000e+00> : vector<8x128xf32>
    %105 = tpu.matmul %102, %104, %cst_25 {dimension_numbers = #tpu.dot_dimension_numbers<[1], [0], [0], [1], [0, 0, 1, 1], [], []>} : vector<8x256xbf16>, vector<256x128xbf16>, vector<8x128xf32> -> vector<8x128xf32>
    %106 = arith.addf %101, %105 : vector<8x128xf32>
    %c0_26 = arith.constant 0 : index
    %c0_27 = arith.constant 0 : index
    %107 = vector.load %arg4[%c0_26, %c0_27] : memref<8x128xf32, #tpu.memory_space<vmem>>, vector<8x128xf32>
    tpu.vector_store %arg4[%c0_26, %c0_27], %106 {strides = array<i32>} : memref<8x128xf32, #tpu.memory_space<vmem>>, vector<8x128xf32>,
    %c0_i32_28 = arith.constant 0 : i32
    %108 = arith.cmpi eq, %arg1, %c0_i32_28 : i32
    %109 = arith.extui %108 : i1 to i32
    %c0_i32_29 = arith.constant 0 : i32
    %110 = arith.cmpi ne, %109, %c0_i32_29 : i32
    scf.if %110 {
      %c0_i32_30 = arith.constant 0 : i32
      %111 = vector.broadcast %c0_i32_30 : i32 to vector<8x8xi32>
      %112 = arith.cmpi ne, %4, %111 : vector<8x8xi32>
      %113 = arith.extui %112 : vector<8x8xi1> to vector<8x8xi32>
      %114 = arith.sitofp %113 : vector<8x8xi32> to vector<8x8xf32>
      %cst_31 = arith.constant dense<0.000000e+00> : vector<8xf32>
      %115 = vector.multi_reduction <add>, %114, %cst_31 [1] : vector<8x8xf32> to vector<8xf32>
      %116 = vector.shape_cast %115 : vector<8xf32> to vector<8x1xf32>
      %cst_32 = arith.constant 1.000000e+00 : f32
      %117 = vector.broadcast %cst_32 : f32 to vector<8x1xf32>
      %118 = arith.maximumf %116, %117 : vector<8x1xf32>
      %119 = tpu.reciprocal %118 {approx = true} : vector<8x1xf32> -> vector<8x1xf32>
      %c0_33 = arith.constant 0 : index
      %c0_34 = arith.constant 0 : index
      %120 = vector.load %arg4[%c0_33, %c0_34] : memref<8x128xf32, #tpu.memory_space<vmem>>, vector<8x128xf32>
      %121 = vector.broadcast %119 : vector<8x1xf32> to vector<8x128xf32>
      %122 = arith.mulf %120, %121 : vector<8x128xf32>
      %c0_35 = arith.constant 0 : index
      %c0_36 = arith.constant 0 : index
      %123 = vector.load %arg4[%c0_35, %c0_36] : memref<8x128xf32, #tpu.memory_space<vmem>>, vector<8x128xf32>
      tpu.vector_store %arg4[%c0_35, %c0_36], %122 {strides = array<i32>} : memref<8x128xf32, #tpu.memory_space<vmem>>, vector<8x128xf32>,
    } else {
    }
    return
  }
  func.func @transform_0(%arg0: i32, %arg1: i32) -> (i32, i32, i32) {
    %c0_i32 = arith.constant 0 : i32
    %c0_i32_0 = arith.constant 0 : i32
    %c0_i32_1 = arith.constant 0 : i32
    return %arg0, %c0_i32, %c0_i32_0 : i32, i32, i32
  }
  func.func @transform_1(%arg0: i32, %arg1: i32) -> (i32, i32, i32) {
    %c0_i32 = arith.constant 0 : i32
    %c0_i32_0 = arith.constant 0 : i32
    return %arg0, %arg1, %c0_i32 : i32, i32, i32
  }
  func.func @transform_2(%arg0: i32, %arg1: i32) -> (i32, i32) {
    %c0_i32 = arith.constant 0 : i32
    %c0_i32_0 = arith.constant 0 : i32
    return %c0_i32, %arg0 : i32, i32
  }
}

</mosaic_0001>

<llo_original>
// kernel: tpu_custom_call.1
$region0: #{tpu_custom_call.1}
  #allocation0 [shape = 'u32[]', space=smem, size = 0x4, offset = 0x4, fixed_abs, tag = 'smem constant byte address 0x4 - core index']
  #allocation1 [shape = 'u32[144,128]{1,0:T(1,128)}', space=vmem, size = 0x12000, scoped, tag = 'internal scratch']
  %s0 = inlined_call_operand.hbm [shape: s32[2,8,8], index: 0, kind: input, shape index: {}]
  %s1 = inlined_call_operand.hbm [shape: bf16[2,256,128], index: 1, kind: input, shape index: {}]
  %s2 = inlined_call_operand.hbm [shape: f32[8,256], index: 2, kind: output, shape index: {}]
  %s3 = sld [smem:[#allocation0]]
  $region57: #{tpu_custom_call.1} parent=0
    _
  %s5 = ssub.s32 1, %s3
  %s6 = scalar_select 0, %s5, %s3
  $region1: #{tpu_custom_call.1} parent=0
    #allocation2 [shape = 'u8[8192]{0}', space=vmem, size = 0x2000, scoped, tag = 'input window, operand 0']
    #allocation3 [shape = 's32[2]{0}', space=sflag, size = 0x8, scoped, tag = 'scoped memory for tpu_custom_call.1']
    #allocation4 [shape = 's32[2]{0}', space=sflag, size = 0x8, scoped, tag = 'scoped memory for tpu_custom_call.1']
    #allocation5 [shape = 'u8[131072]{0}', space=vmem, size = 0x20000, scoped, tag = 'input window, operand 1']
    #allocation6 [shape = 's32[2]{0}', space=sflag, size = 0x8, scoped, tag = 'scoped memory for tpu_custom_call.1']
    #allocation7 [shape = 'u8[8192]{0}', space=vmem, size = 0x2000, scoped, tag = 'output window, operand 0']
    %7 = vsyncpa [#allocation3], 0
    %s8 = scalar_lea.sflag [#allocation3], 1
    %9 = vsyncpa %s8, 0
    %10 = vsyncpa [#allocation6], 0
    %s11 = scalar_lea.sflag [#allocation6], 1
    %12 = vsyncpa %s11, 0
    %13 = vsyncpa [#allocation4], 0
    %s14 = scalar_lea.sflag [#allocation4], 1
    %15 = vsyncpa %s14, 0
    loop: start=0, step=1, limit=4
    $region2: #{tpu_custom_call.1} parent=1 // loop_pre_header
      _
    $region3: #{tpu_custom_call.1} parent=1 // loop_header
      %s17 = sphi 0, %s21
      %p18 = scmp.ge.s32.totalorder %s17, 4
      %s24 = sphi 0, %s36
      %s25 = sphi 0, %s32
      %s26 = sphi 0, %s24
      %s27 = sphi 0, %s25
      %s28 = sphi 0, %s26
      %s29 = sphi 0, %s27
      %s39 = sphi 0, %s41
      %s42 = sphi 0, %s39
      %s43 = sphi 0, %s42
      %s59 = sphi 0, %s43
      %s67 = sphi 0, %s69
      %s70 = sphi 0, %s67
      %s71 = sphi 0, %s70
      %s87 = sphi 0, %s71
      %s93 = sphi 0, %s95
      %s96 = sphi 0, %s93
      %s97 = sphi 0, %s96
      %s113 = sphi 0, %s97
    $region4: #{tpu_custom_call.1} parent=1 // loop_header_branch
      %20 = sbr.rel (%p18) target = $region8
    $region5: #{tpu_custom_call.1} parent=1 // loop_body
      %s22 = ssub.s32 %s17, 1
      %s23 = ssub.s32 %s17, 2
      %s30 = sadd.s32 1, %s25
      %p31 = scmp.ge.s32.totalorder %s30, 1
      %s32 = scalar_select %p31, 0, %s30
      %s33 = sadd.s32 1, %s24
      %s34 = scalar_select %p31, %s33, %s24
      %p35 = scmp.ge.s32.totalorder %s34, 2
      %s36 = scalar_select %p35, 0, %s34
      %s37 = ssub.s32 %s24, %s36
      %p38 = scmp.eq.s32.totalorder %s37, 0
      %s40 = sadd.s32 %s39, 1
      %s41 = scalar_select %p38, %s39, %s40
      %p44 = pneg %p38
      %p45 = scmp.eq.s32.totalorder %s17, 1
      %p46 = por %p44, %p45
      %p47 = scmp.ne.s32.totalorder %s39, %s42
      %p48 = scmp.eq.s32.totalorder %s17, 0
      %p49 = por %p47, %p48
      %p50 = scmp.ne.s32.totalorder %s39, %s42
      %p51 = scmp.eq.s32.totalorder %s22, 1
      %p52 = por %p50, %p51
      %p53 = scmp.ne.s32.totalorder %s42, %s43
      %p54 = scmp.eq.s32.totalorder %s22, 0
      %p55 = por %p53, %p54
      %p56 = scmp.ne.s32.totalorder %s42, %s43
      %p57 = scmp.eq.s32.totalorder %s23, 1
      %p58 = por %p56, %p57
      %p60 = scmp.ne.s32.totalorder %s43, %s59
      %p61 = scmp.eq.s32.totalorder %s23, 0
      %p62 = por %p60, %p61
      %s63 = ssub.s32 %s24, %s36
      %s64 = ssub.s32 %s25, %s32
      %s65 = sor.u32 %s63, %s64
      %p66 = scmp.eq.s32.totalorder %s65, 0
      %s68 = sadd.s32 %s67, 1
      %s69 = scalar_select %p66, %s67, %s68
      %p72 = pneg %p66
      %p73 = scmp.eq.s32.totalorder %s17, 1
      %p74 = por %p72, %p73
      %p75 = scmp.ne.s32.totalorder %s67, %s70
      %p76 = scmp.eq.s32.totalorder %s17, 0
      %p77 = por %p75, %p76
      %p78 = scmp.ne.s32.totalorder %s67, %s70
      %p79 = scmp.eq.s32.totalorder %s22, 1
      %p80 = por %p78, %p79
      %p81 = scmp.ne.s32.totalorder %s70, %s71
      %p82 = scmp.eq.s32.totalorder %s22, 0
      %p83 = por %p81, %p82
      %p84 = scmp.ne.s32.totalorder %s70, %s71
      %p85 = scmp.eq.s32.totalorder %s23, 1
      %p86 = por %p84, %p85
      %p88 = scmp.ne.s32.totalorder %s71, %s87
      %p89 = scmp.eq.s32.totalorder %s23, 0
      %p90 = por %p88, %p89
      %s91 = ssub.s32 %s24, %s36
      %p92 = scmp.eq.s32.totalorder %s91, 0
      %s94 = sadd.s32 %s93, 1
      %s95 = scalar_select %p92, %s93, %s94
      %p98 = pneg %p92
      %p99 = scmp.eq.s32.totalorder %s17, 1
      %p100 = por %p98, %p99
      %p101 = scmp.ne.s32.totalorder %s93, %s96
      %p102 = scmp.eq.s32.totalorder %s17, 0
      %p103 = por %p101, %p102
      %p104 = scmp.ne.s32.totalorder %s93, %s96
      %p105 = scmp.eq.s32.totalorder %s22, 1
      %p106 = por %p104, %p105
      %p107 = scmp.ne.s32.totalorder %s96, %s97
      %p108 = scmp.eq.s32.totalorder %s22, 0
      %p109 = por %p107, %p108
      %p110 = scmp.ne.s32.totalorder %s96, %s97
      %p111 = scmp.eq.s32.totalorder %s23, 1
      %p112 = por %p110, %p111
      %p114 = scmp.ne.s32.totalorder %s97, %s113
      %p115 = scmp.eq.s32.totalorder %s23, 0
      %p116 = por %p114, %p115
      %p117 = scmp.le.s32.totalorder 1, %s17
      %p118 = scmp.lt.s32.totalorder %s17, 3
      %p119 = pnand %p117, %p118
      %p120 = pneg %p119
      // Predicated region
      $region9: #{tpu_custom_call.1} parent=5 // pred_check
        _
      $region10: #{tpu_custom_call.1} parent=5 // pred_check_branch
        %122 = sbr.rel (%p119) target = $region12
      $region11: #{tpu_custom_call.1} parent=5 // pred_region
        %s123 = ssub.s32 %s17, 1
      $region12: #{tpu_custom_call.1} parent=5 // pred_fallthru
        _
      %p124 = scmp.lt.s32.totalorder %s17, 2
      // Predicated region
      $region13: #{tpu_custom_call.1} parent=5 // pred_check
        %p125 = pneg %p124
      $region14: #{tpu_custom_call.1} parent=5 // pred_check_branch
        %127 = sbr.rel (%p125) target = $region16
      $region15: #{tpu_custom_call.1} parent=5 // pred_region
        // Predicated region
        $region17: #{tpu_custom_call.1} parent=15 // pred_check
          %p128 = pneg %p49
        $region18: #{tpu_custom_call.1} parent=15 // pred_check_branch
          %130 = sbr.rel (%p128) target = $region20
        $region19: #{tpu_custom_call.1} parent=15 // pred_region
          %s131 = sand.u32 %s39, 1
          %s132 = scalar_lea.sflag [#allocation3], %s131
          %s133 = sand.u32 %s39, 1
          %s134 = smul.addr %s133, 8
          %s135 = scalar_lea.vmem [#allocation2], %s134
          %s137 = ssub.s32 128, 128
          %138 = vsyncadd %s132, %s137
          %s139 = smul.addr %s24, 128
          %s140 = scalar_lea.hbm %s0, %s139
          %s142 = sshll.u32 %s135, 4
          %s143 = int_to_ptr.vmem [resolvable:$true] %s142
          %145 = dma.hbm_to_vmem [thread:$0]  %s140, 128, %s143, %s132
        $region20: #{tpu_custom_call.1} parent=15 // pred_fallthru
          _
        // Predicated region
        $region21: #{tpu_custom_call.1} parent=15 // pred_check
          %p146 = pneg %p77
        $region22: #{tpu_custom_call.1} parent=15 // pred_check_branch
          %148 = sbr.rel (%p146) target = $region24
        $region23: #{tpu_custom_call.1} parent=15 // pred_region
          %s149 = sand.u32 %s67, 1
          %s150 = scalar_lea.sflag [#allocation6], %s149
          %s151 = sand.u32 %s67, 1
          %s152 = smul.addr %s151, 128
          %s153 = scalar_lea.vmem [#allocation5], %s152
          %s154 = smul.u32 32, %s25
          %s156 = ssub.s32 2048, 2048
          %157 = vsyncadd %s150, %s156
          %s158 = smul.addr %s24, 32
          %s159 = sadd.s32 %s154, %s158
          %s160 = smul.addr %s159, 64
          %s161 = scalar_lea.hbm %s1, %s160
          %s162 = sshll.u32 %s153, 4
          %s163 = int_to_ptr.vmem [resolvable:$true] %s162
          %168 = dma.hbm_to_vmem [thread:$0]  %s161, 2048, %s163, %s150, 64, 64, 4
        $region24: #{tpu_custom_call.1} parent=15 // pred_fallthru
          _
      $region16: #{tpu_custom_call.1} parent=5 // pred_fallthru
        _
      %p169 = scmp.le.s32.totalorder 1, %s17
      %p170 = scmp.lt.s32.totalorder %s17, 3
      %p171 = pnand %p169, %p170
      %p172 = pneg %p171
      // Predicated region
      $region25: #{tpu_custom_call.1} parent=5 // pred_check
        _
      $region26: #{tpu_custom_call.1} parent=5 // pred_check_branch
        %174 = sbr.rel (%p171) target = $region28
      $region27: #{tpu_custom_call.1} parent=5 // pred_region
        %s175 = ssub.s32 %s17, 1
        %s176 = sand.u32 %s42, 1
        %s177 = scalar_lea.sflag [#allocation3], %s176
        %s178 = sand.u32 %s42, 1
        %s179 = smul.addr %s178, 8
        %s180 = scalar_lea.vmem [#allocation2], %s179
        // Predicated region
        $region29: #{tpu_custom_call.1} parent=27 // pred_check
          %p181 = pneg %p55
        $region30: #{tpu_custom_call.1} parent=27 // pred_check_branch
          %183 = sbr.rel (%p181) target = $region32
        $region31: #{tpu_custom_call.1} parent=27 // pred_region
          %184 = dma.done %s177, 128
        $region32: #{tpu_custom_call.1} parent=27 // pred_fallthru
          _
        %s185 = sand.u32 %s70, 1
        %s186 = scalar_lea.sflag [#allocation6], %s185
        %s187 = sand.u32 %s70, 1
        %s188 = smul.addr %s187, 128
        %s189 = scalar_lea.vmem [#allocation5], %s188
        // Predicated region
        $region33: #{tpu_custom_call.1} parent=27 // pred_check
          %p190 = pneg %p83
        $region34: #{tpu_custom_call.1} parent=27 // pred_check_branch
          %192 = sbr.rel (%p190) target = $region36
        $region35: #{tpu_custom_call.1} parent=27 // pred_region
          %193 = dma.done %s186, 2048
        $region36: #{tpu_custom_call.1} parent=27 // pred_fallthru
          _
        %s194 = sand.u32 %s42, 1
        %s195 = scalar_lea.sflag [#allocation3], %s194
        %s196 = sand.u32 %s42, 1
        %s197 = smul.addr %s196, 8
        %s198 = scalar_lea.vmem [#allocation2], %s197
        %p199 = pneg %p55
        %p200 = pneg %p52
        %s201 = sand.u32 %s70, 1
        %s202 = scalar_lea.sflag [#allocation6], %s201
        %s203 = sand.u32 %s70, 1
        %s204 = smul.addr %s203, 128
        %s205 = scalar_lea.vmem [#allocation5], %s204
        %p206 = pneg %p83
        %p207 = pneg %p80
        %p208 = pneg %p109
        %p209 = pneg %p106
        %s210 = sand.u32 %s96, 1
        %s211 = scalar_lea.sflag [#allocation4], %s210
        %s212 = sand.u32 %s96, 1
        %s213 = smul.addr %s212, 8
        %s214 = scalar_lea.vmem [#allocation7], %s213
        %s215 = smul.u32 32, %s27
        %p217 = scmp.eq.s32.totalorder %s27, 0
        // Predicated region
        $region37: #{tpu_custom_call.1} parent=27 // pred_check
          %p218 = pneg %p217
        $region38: #{tpu_custom_call.1} parent=27 // pred_check_branch
          %220 = sbr.rel (%p218) target = $region40
        $region39: #{tpu_custom_call.1} parent=27 // pred_region
          %221 = vst [vmem:[%s214] sm:$0xff] 0.0
        $region40: #{tpu_custom_call.1} parent=27 // pred_fallthru
          _
        %v222 = vld [vmem:[%s180] sm:$0xff]
        %v223 = vlaneseq
        %v224 = vand.u32 %v223, 127
        %v225 = vadd.s32 %v224, 128
        %s226 = smul.u32 %s27, 256
        %v227 = vstv %s226
        %v228 = vadd.s32 %v224, %v227
        %v229 = vadd.s32 %v225, %v227
        %v230 = vcvt.s32.f32 %v228
        %v231 = vcvt.s32.f32 %v229
        %v232 = vcvt.s32.f32 %v222
        %vm233 = vcmp.eq.s32.totalorder %v224, 0
        %v234 = vsel %vm233, %v232, 0.0
        %vm235 = vcmask 64512
        %v236 = vsel %vm235, %v234, 0.0
        %237 = vadd.xlane.f32.xlu0 %v236
        %v238 = vpop.xlane.xlu0 %237
        %vm239 = vcmp.eq.f32.partialorder %v238, %v230
        %vm240 = vcmp.eq.f32.partialorder %v238, %v231
        %v241 = vsel %vm239, 1, 0
        %v242 = vsel %vm240, 1, 0
        %v243 = vcvt.s32.f32 %v241
        %v244 = vcvt.s32.f32 %v242
        %v245 = vadd.f32 %v243, 0.0
        %v246 = vadd.f32 %v244, 0.0
        %vm247 = vcmp.eq.s32.totalorder %v224, 1
        %v248 = vsel %vm247, %v232, 0.0
        %v249 = vsel %vm235, %v248, 0.0
        %250 = vadd.xlane.f32.xlu0 %v249
        %v251 = vpop.xlane.xlu0 %250
        %vm252 = vcmp.eq.f32.partialorder %v251, %v230
        %vm253 = vcmp.eq.f32.partialorder %v251, %v231
        %v254 = vsel %vm252, 1, 0
        %v255 = vsel %vm253, 1, 0
        %v256 = vcvt.s32.f32 %v254
        %v257 = vcvt.s32.f32 %v255
        %v258 = vadd.f32 %v245, %v256
        %v259 = vadd.f32 %v246, %v257
        %vm260 = vcmp.eq.s32.totalorder %v224, 2
        %v261 = vsel %vm260, %v232, 0.0
        %v262 = vsel %vm235, %v261, 0.0
        %263 = vadd.xlane.f32.xlu0 %v262
        %v264 = vpop.xlane.xlu0 %263
        %vm265 = vcmp.eq.f32.partialorder %v264, %v230
        %vm266 = vcmp.eq.f32.partialorder %v264, %v231
        %v267 = vsel %vm265, 1, 0
        %v268 = vsel %vm266, 1, 0
        %v269 = vcvt.s32.f32 %v267
        %v270 = vcvt.s32.f32 %v268
        %v271 = vadd.f32 %v258, %v269
        %v272 = vadd.f32 %v259, %v270
        %vm273 = vcmp.eq.s32.totalorder %v224, 3
        %v274 = vsel %vm273, %v232, 0.0
        %v275 = vsel %vm235, %v274, 0.0
        %276 = vadd.xlane.f32.xlu0 %v275
        %v277 = vpop.xlane.xlu0 %276
        %vm278 = vcmp.eq.f32.partialorder %v277, %v230
        %vm279 = vcmp.eq.f32.partialorder %v277, %v231
        %v280 = vsel %vm278, 1, 0
        %v281 = vsel %vm279, 1, 0
        %v282 = vcvt.s32.f32 %v280
        %v283 = vcvt.s32.f32 %v281
        %v284 = vadd.f32 %v271, %v282
        %v285 = vadd.f32 %v272, %v283
        %vm286 = vcmp.eq.s32.totalorder %v224, 4
        %v287 = vsel %vm286, %v232, 0.0
        %v288 = vsel %vm235, %v287, 0.0
        %289 = vadd.xlane.f32.xlu0 %v288
        %v290 = vpop.xlane.xlu0 %289
        %vm291 = vcmp.eq.f32.partialorder %v290, %v230
        %vm292 = vcmp.eq.f32.partialorder %v290, %v231
        %v293 = vsel %vm291, 1, 0
        %v294 = vsel %vm292, 1, 0
        %v295 = vcvt.s32.f32 %v293
        %v296 = vcvt.s32.f32 %v294
        %v297 = vadd.f32 %v284, %v295
        %v298 = vadd.f32 %v285, %v296
        %vm299 = vcmp.eq.s32.totalorder %v224, 5
        %v300 = vsel %vm299, %v232, 0.0
        %v301 = vsel %vm235, %v300, 0.0
        %302 = vadd.xlane.f32.xlu0 %v301
        %v303 = vpop.xlane.xlu0 %302
        %vm304 = vcmp.eq.f32.partialorder %v303, %v230
        %vm305 = vcmp.eq.f32.partialorder %v303, %v231
        %v306 = vsel %vm304, 1, 0
        %v307 = vsel %vm305, 1, 0
        %v308 = vcvt.s32.f32 %v306
        %v309 = vcvt.s32.f32 %v307
        %v310 = vadd.f32 %v297, %v308
        %v311 = vadd.f32 %v298, %v309
        %vm312 = vcmp.eq.s32.totalorder %v224, 6
        %v313 = vsel %vm312, %v232, 0.0
        %v314 = vsel %vm235, %v313, 0.0
        %315 = vadd.xlane.f32.xlu0 %v314
        %v316 = vpop.xlane.xlu0 %315
        %vm317 = vcmp.eq.f32.partialorder %v316, %v230
        %vm318 = vcmp.eq.f32.partialorder %v316, %v231
        %v319 = vsel %vm317, 1, 0
        %v320 = vsel %vm318, 1, 0
        %v321 = vcvt.s32.f32 %v319
        %v322 = vcvt.s32.f32 %v320
        %v323 = vadd.f32 %v310, %v321
        %v324 = vadd.f32 %v311, %v322
        %vm325 = vcmp.eq.s32.totalorder %v224, 7
        %v326 = vsel %vm325, %v232, 0.0
        %v327 = vsel %vm235, %v326, 0.0
        %328 = vadd.xlane.f32.xlu0 %v327
        %v329 = vpop.xlane.xlu0 %328
        %vm330 = vcmp.eq.f32.partialorder %v329, %v230
        %vm331 = vcmp.eq.f32.partialorder %v329, %v231
        %v332 = vsel %vm330, 1, 0
        %v333 = vsel %vm331, 1, 0
        %v334 = vcvt.s32.f32 %v332
        %v335 = vcvt.s32.f32 %v333
        %v336 = vadd.f32 %v323, %v334
        %v337 = vadd.f32 %v324, %v335
        %v338 = vld [vmem:[%s214] sm:$0xff]
        %v339 = vpack.c.bf16 %v336, %v336
        %v340 = vpack.c.bf16 %v337, %v337
        %v341 = vld [vmem:[%s189] sm:$0xf]
        %v342 = vld [vmem:[%s189 + $0x4] sm:$0xf]
        %v343 = vld [vmem:[%s189 + $0x8] sm:$0xf]
        %v344 = vld [vmem:[%s189 + $0xc] sm:$0xf]
        %v345 = vld [vmem:[%s189 + $0x10] sm:$0xf]
        %v346 = vld [vmem:[%s189 + $0x14] sm:$0xf]
        %v347 = vld [vmem:[%s189 + $0x18] sm:$0xf]
        %v348 = vld [vmem:[%s189 + $0x1c] sm:$0xf]
        %v349 = vld [vmem:[%s189 + $0x20] sm:$0xf]
        %v350 = vld [vmem:[%s189 + $0x24] sm:$0xf]
        %v351 = vld [vmem:[%s189 + $0x28] sm:$0xf]
        %v352 = vld [vmem:[%s189 + $0x2c] sm:$0xf]
        %v353 = vld [vmem:[%s189 + $0x30] sm:$0xf]
        %v354 = vld [vmem:[%s189 + $0x34] sm:$0xf]
        %v355 = vld [vmem:[%s189 + $0x38] sm:$0xf]
        %v356 = vld [vmem:[%s189 + $0x3c] sm:$0xf]
        %v357 = vld [vmem:[%s189 + $0x40] sm:$0xf]
        %v358 = vld [vmem:[%s189 + $0x44] sm:$0xf]
        %v359 = vld [vmem:[%s189 + $0x48] sm:$0xf]
        %v360 = vld [vmem:[%s189 + $0x4c] sm:$0xf]
        %v361 = vld [vmem:[%s189 + $0x50] sm:$0xf]
        %v362 = vld [vmem:[%s189 + $0x54] sm:$0xf]
        %v363 = vld [vmem:[%s189 + $0x58] sm:$0xf]
        %v364 = vld [vmem:[%s189 + $0x5c] sm:$0xf]
        %v365 = vld [vmem:[%s189 + $0x60] sm:$0xf]
        %v366 = vld [vmem:[%s189 + $0x64] sm:$0xf]
        %v367 = vld [vmem:[%s189 + $0x68] sm:$0xf]
        %v368 = vld [vmem:[%s189 + $0x6c] sm:$0xf]
        %v369 = vld [vmem:[%s189 + $0x70] sm:$0xf]
        %v370 = vld [vmem:[%s189 + $0x74] sm:$0xf]
        %v371 = vld [vmem:[%s189 + $0x78] sm:$0xf]
        %v372 = vld [vmem:[%s189 + $0x7c] sm:$0xf]
        %v405 = vunpack.c.l.b16 %v341
        %v406 = vunpack.c.l.b16 %v342
        %v407 = vunpack.c.l.b16 %v343
        %v408 = vunpack.c.l.b16 %v344
        %v409 = vunpack.c.l.b16 %v345
        %v410 = vunpack.c.l.b16 %v346
        %v411 = vunpack.c.l.b16 %v347
        %v412 = vunpack.c.l.b16 %v348
        %v413 = vunpack.c.l.b16 %v349
        %v414 = vunpack.c.l.b16 %v350
        %v415 = vunpack.c.l.b16 %v351
        %v416 = vunpack.c.l.b16 %v352
        %v417 = vunpack.c.l.b16 %v353
        %v418 = vunpack.c.l.b16 %v354
        %v419 = vunpack.c.l.b16 %v355
        %v420 = vunpack.c.l.b16 %v356
        %v421 = vunpack.c.l.b16 %v357
        %v422 = vunpack.c.l.b16 %v358
        %v423 = vunpack.c.l.b16 %v359
        %v424 = vunpack.c.l.b16 %v360
        %v425 = vunpack.c.l.b16 %v361
        %v426 = vunpack.c.l.b16 %v362
        %v427 = vunpack.c.l.b16 %v363
        %v428 = vunpack.c.l.b16 %v364
        %v429 = vunpack.c.l.b16 %v365
        %v430 = vunpack.c.l.b16 %v366
        %v431 = vunpack.c.l.b16 %v367
        %v432 = vunpack.c.l.b16 %v368
        %v433 = vunpack.c.l.b16 %v369
        %v434 = vunpack.c.l.b16 %v370
        %v435 = vunpack.c.l.b16 %v371
        %v436 = vunpack.c.l.b16 %v372
        %v437 = vpack.c.b16 %v406, %v405
        %v438 = vpack.c.b16 %v408, %v407
        %v439 = vpack.c.b16 %v410, %v409
        %v440 = vpack.c.b16 %v412, %v411
        %v441 = vpack.c.b16 %v414, %v413
        %v442 = vpack.c.b16 %v416, %v415
        %v443 = vpack.c.b16 %v418, %v417
        %v444 = vpack.c.b16 %v420, %v419
        %v445 = vpack.c.b16 %v422, %v421
        %v446 = vpack.c.b16 %v424, %v423
        %v447 = vpack.c.b16 %v426, %v425
        %v448 = vpack.c.b16 %v428, %v427
        %v449 = vpack.c.b16 %v430, %v429
        %v450 = vpack.c.b16 %v432, %v431
        %v451 = vpack.c.b16 %v434, %v433
        %v452 = vpack.c.b16 %v436, %v435
        %469 = vmatprep.subr.bf16.mxu0 0
        %470 = vmatpush1.bf16.msra.mxu0 %v437
        %471 = vmatprep.subr.bf16.mxu0 0
        %472 = vmatpush1.bf16.msra.mxu0 %v438
        %473 = vmatprep.subr.bf16.mxu0 0
        %474 = vmatpush1.bf16.msra.mxu0 %v439
        %475 = vmatprep.subr.bf16.mxu0 0
        %476 = vmatpush1.bf16.msra.mxu0 %v440
        %477 = vmatprep.subr.bf16.mxu0 0
        %478 = vmatpush1.bf16.msra.mxu0 %v441
        %479 = vmatprep.subr.bf16.mxu0 0
        %480 = vmatpush1.bf16.msra.mxu0 %v442
        %481 = vmatprep.subr.bf16.mxu0 0
        %482 = vmatpush1.bf16.msra.mxu0 %v443
        %483 = vmatprep.subr.bf16.mxu0 0
        %484 = vmatpush1.bf16.msra.mxu0 %v444
        %485 = vmatprep.subr.bf16.mxu0 0
        %486 = vmatpush1.bf16.msra.mxu0 %v445
        %487 = vmatprep.subr.bf16.mxu0 0
        %488 = vmatpush1.bf16.msra.mxu0 %v446
        %489 = vmatprep.subr.bf16.mxu0 0
        %490 = vmatpush1.bf16.msra.mxu0 %v447
        %491 = vmatprep.subr.bf16.mxu0 0
        %492 = vmatpush1.bf16.msra.mxu0 %v448
        %493 = vmatprep.subr.bf16.mxu0 0
        %494 = vmatpush1.bf16.msra.mxu0 %v449
        %495 = vmatprep.subr.bf16.mxu0 0
        %496 = vmatpush1.bf16.msra.mxu0 %v450
        %497 = vmatprep.subr.bf16.mxu0 0
        %498 = vmatpush1.bf16.msra.mxu0 %v451
        %499 = vmatprep.subr.bf16.mxu0 0
        %500 = vmatpush1.bf16.msra.mxu0 %v452
        %501 = vmatprep.mubr.bf16.mxu0 %v340
        %502 = vmatmul.mubr.bf16.gmra.mrb[0].mxu0 %v339
        %v503 = vpop.f32.mrb[0].mxu0
        %v504 = vadd.f32 0.0, %v503
        %v505 = vpop.f32.mrb[0].mxu0
        %v506 = vpop.f32.mrb[0].mxu0
        %v507 = vpop.f32.mrb[0].mxu0
        %508 = vdwg.mxu0
        %v509 = vadd.f32 %v338, %v504
        %510 = vst [vmem:[%s214] sm:$0xff] %v509
        // Predicated region
        $region41: #{tpu_custom_call.1} parent=27 // pred_check
          %p511 = pneg %p217
        $region42: #{tpu_custom_call.1} parent=27 // pred_check_branch
          %513 = sbr.rel (%p511) target = $region44
        $region43: #{tpu_custom_call.1} parent=27 // pred_region
          %vm514 = vcmp.ne.s32.totalorder %v222, 0
          %v515 = vsel %vm514, 1, 0
          %v516 = vcvt.s32.f32 %v515
          %v517 = vsel %vm235, %v516, 0.0
          %518 = vadd.xlane.f32.xlu0 %v517
          %v519 = vpop.xlane.xlu0 %518
          %v520 = vmax.f32 %v519, 1.0
          %v521 = vrcp.pop %v520
          %v522 = vld [vmem:[%s214] sm:$0xff]
          %v523 = vmul.f32 %v522, %v521
          %524 = vst [vmem:[%s214] sm:$0xff] %v523
        $region44: #{tpu_custom_call.1} parent=27 // pred_fallthru
          _
        %s525 = sand.u32 %s96, 1
        %s526 = scalar_lea.sflag [#allocation4], %s525
        %s527 = sand.u32 %s96, 1
        %s528 = smul.addr %s527, 8
        %s529 = scalar_lea.vmem [#allocation7], %s528
        // Predicated region
        $region45: #{tpu_custom_call.1} parent=27 // pred_check
          %p530 = pneg %p106
        $region46: #{tpu_custom_call.1} parent=27 // pred_check_branch
          %532 = sbr.rel (%p530) target = $region48
        $region47: #{tpu_custom_call.1} parent=27 // pred_region
          %s534 = ssub.s32 128, 128
          %535 = vsyncadd %s526, %s534
          %s536 = smul.addr %s26, 128
          %s537 = scalar_lea.hbm %s2, %s536
          %s539 = sshll.u32 %s529, 4
          %s540 = int_to_ptr.vmem [resolvable:$true] %s539
          %542 = dma.vmem_to_hbm [thread:$0]  %s540, 128, %s537, %s526
        $region48: #{tpu_custom_call.1} parent=27 // pred_fallthru
          _
      $region28: #{tpu_custom_call.1} parent=5 // pred_fallthru
        _
      %p543 = scmp.le.s32.totalorder 2, %s17
      // Predicated region
      $region49: #{tpu_custom_call.1} parent=5 // pred_check
        %p544 = pneg %p543
      $region50: #{tpu_custom_call.1} parent=5 // pred_check_branch
        %546 = sbr.rel (%p544) target = $region52
      $region51: #{tpu_custom_call.1} parent=5 // pred_region
        %s547 = ssub.s32 %s17, 2
        // Predicated region
        $region53: #{tpu_custom_call.1} parent=51 // pred_check
          %p548 = pneg %p112
        $region54: #{tpu_custom_call.1} parent=51 // pred_check_branch
          %550 = sbr.rel (%p548) target = $region56
        $region55: #{tpu_custom_call.1} parent=51 // pred_region
          %s551 = sand.u32 %s97, 1
          %s552 = scalar_lea.sflag [#allocation4], %s551
          %s553 = sand.u32 %s97, 1
          %s554 = smul.addr %s553, 8
          %s555 = scalar_lea.vmem [#allocation7], %s554
          %556 = dma.done %s552, 128
        $region56: #{tpu_custom_call.1} parent=51 // pred_fallthru
          _
      $region52: #{tpu_custom_call.1} parent=5 // pred_fallthru
        _
    $region6: #{tpu_custom_call.1} parent=1 // loop_footer
      %s21 = sadd.s32 1, %s17
    $region7: #{tpu_custom_call.1} parent=1 // loop_footer_branch
      %16 = sbr.rel target = $region3
    $region8: #{tpu_custom_call.1} parent=1 // loop_exit
      _
    %557 = vsyncpa [#allocation3], 1
    %s558 = scalar_lea.sflag [#allocation3], 1
    %559 = vsyncpa %s558, 1
    %560 = vsyncpa [#allocation6], 1
    %s561 = scalar_lea.sflag [#allocation6], 1
    %562 = vsyncpa %s561, 1
    %563 = vsyncpa [#allocation4], 1
    %s564 = scalar_lea.sflag [#allocation4], 1
    %565 = vsyncpa %s564, 1

</llo_original>
